<compile_context>
chip_gen: v5e
topology: v5e:2x2
jax: 0.10.0
libtpu: 0.0.40
codegen_flags: <defaults>
</compile_context>

<pallas_src>
import functools
import math

import jax
import jax.numpy as jnp
from jax.experimental import pallas as pl
from jax.experimental.pallas import tpu as pltpu


def _round_up(x, m):
    return (x + m - 1) // m * m


def _cdiv(a, b):
    return (a + b - 1) // b


def mlp_kernel(x_ref, w1_ref, b1_ref, w2_ref, b2_ref, o_ref, *, chunk):
    """One batch tile of packed rows: (TB_P, LW) -> (TB_P, PACK).

    The tile is processed in `chunk`-packed-row sub-chunks inside an unrolled
    fori_loop so the live vreg set stays bounded (h is (chunk, PACK*H) f32)
    while the whole-tile input DMA stays one large copy.
    """
    nchunks = x_ref.shape[0] // chunk           # static
    b1_row = b1_ref[...]                        # (1, PACK*H): 2 vregs, loop-invariant
    b2 = b2_ref[0, 0]                           # scalar bias from SMEM

    def body(c, carry):
        i = pl.multiple_of(c * chunk, 8)        # sublane-aligned dynamic start
        xb = x_ref[pl.ds(i, chunk), :]          # (chunk, LW), lane-dense
        # Layer 1 on the MXU: block-diagonal W1' computes all PACK packed rows
        # of hidden activations in one K=LW, N=PACK*H matmul (f32 accumulate).
        h = jnp.dot(xb, w1_ref[...], preferred_element_type=jnp.float32)
        h = jnp.maximum(h + b1_row, 0.0)        # (chunk, PACK*H), VPU
        # Layer 2: block-diagonal w2 column blocks == segmented reduce over the
        # H lanes of each packed row, done as a small MXU matmul -> (chunk, PACK).
        y = jnp.dot(h, w2_ref[...], preferred_element_type=jnp.float32)
        y = jnp.maximum(y + b2, 0.0)
        o_ref[pl.ds(i, chunk), :] = y.astype(o_ref.dtype)
        return carry

    jax.lax.fori_loop(0, nchunks, body, 0, unroll=True)


def _mlp_call(xp, w1p, b1p, w2p, b2s, *, tb_p, chunk_p):
    """Run the kernel over an already-packed, tile-aligned batch.

    xp: (Bp, LW) with Bp % tb_p == 0 and tb_p % chunk_p == 0. Returns (Bp, PACK) f32.
    """
    Bp, lw = xp.shape
    pack = w2p.shape[1]
    hid_p = w1p.shape[1]
    assert Bp % tb_p == 0 and tb_p % chunk_p == 0
    num_tiles = Bp // tb_p

    cost = pl.CostEstimate(
        flops=2 * Bp * hid_p * (lw + pack),
        transcendentals=0,
        bytes_accessed=4 * (Bp * lw + Bp * pack + w1p.size + b1p.size + w2p.size + 1),
    )

    return pl.pallas_call(
        functools.partial(mlp_kernel, chunk=chunk_p),
        out_shape=jax.ShapeDtypeStruct((Bp, pack), jnp.float32),
        grid=(num_tiles,),
        in_specs=[
            pl.BlockSpec((tb_p, lw), lambda i: (i, 0)),          # x: batch-tiled stream
            pl.BlockSpec(w1p.shape, lambda i: (0, 0)),           # W1': VMEM-resident
            pl.BlockSpec(b1p.shape, lambda i: (0, 0)),           # b1': VMEM-resident
            pl.BlockSpec(w2p.shape, lambda i: (0, 0)),           # W2': VMEM-resident
            pl.BlockSpec(memory_space=pltpu.MemorySpace.SMEM),   # b2: scalar in SMEM
        ],
        out_specs=pl.BlockSpec((tb_p, pack), lambda i: (i, 0)),
        compiler_params=pltpu.CompilerParams(
            # Batch tiles are independent -> shard across both TensorCores on v7x.
            dimension_semantics=("parallel",),
        ),
        cost_estimate=cost,
    )(xp, w1p, b1p, w2p, b2s)


def network_forward(x, w1, b1, w2, b2, *, max_block_packed=2048, chunk_packed=128):
    """Fused 2-layer MLP forward: relu(relu(x @ w1 + b1) @ w2.T + b2) -> (B, 1).

    `pack` (=8 at n_inputs=16) batch rows are packed into each 128-lane vreg
    row; W1/b1/w2 are expanded to block-diagonal/tiled forms so a single dense
    MXU matmul per sub-chunk computes all packed rows.  Batch tiles of
    `max_block_packed` packed rows (~1 MiB of x) amortize per-step pipeline
    overhead; unaligned batches use a main call plus a small padded tail call.
    """
    B, n_in = x.shape
    n_in_w, hidden = w1.shape
    assert n_in == n_in_w
    assert chunk_packed % 8 == 0 and max_block_packed % chunk_packed == 0
    x = x.astype(jnp.float32)

    if B == 0:
        return jnp.zeros((0, 1), jnp.float32)

    pack = max(1, 128 // n_in)          # rows packed per 128-lane vreg row
    lw = pack * n_in                    # packed lane width (=128 for n_in=16)

    # ---- packed parameters (tiny; built per call) ----
    eye = jnp.eye(pack, dtype=jnp.float32)
    w1p = jnp.kron(eye, w1.astype(jnp.float32))                      # (lw, pack*H)
    b1p = jnp.tile(b1.reshape(1, hidden).astype(jnp.float32), (1, pack))   # (1, pack*H)
    w2p = jnp.kron(eye, w2.reshape(hidden, 1).astype(jnp.float32))   # (pack*H, pack)
    b2s = b2.reshape(1, 1).astype(jnp.float32)

    # ---- tile sizing (in packed rows) ----
    B_p = _cdiv(B, pack)
    chunk_p = min(chunk_packed, _round_up(B_p, 8))
    tb_p = min(max_block_packed, _round_up(B_p, chunk_p))
    if tb_p >= B_p and B_p >= 2 * chunk_p:
        # Whole batch would fit in one tile: split into >= 2 tiles so both
        # TensorCores get work on v7x.
        tb_p = _round_up(_cdiv(B_p, 2), chunk_p)
    rows_per_tile = tb_p * pack

    pieces = []

    # ---- main part: exact multiple of the tile -> free reshape, no pad copy ----
    B_main = (B // rows_per_tile) * rows_per_tile
    if B_main > 0:
        xp = x[:B_main].reshape(B_main // pack, lw)   # row-major reshape is free
        y = _mlp_call(xp, w1p, b1p, w2p, b2s, tb_p=tb_p, chunk_p=chunk_p)
        pieces.append(y.reshape(B_main, 1))

    # ---- tail: at most one tile's worth of rows, padded (cheap) ----
    tail = B - B_main
    if tail > 0:
        tail_p = _cdiv(tail, pack)
        if tail_p <= chunk_p:
            tb_tail = _round_up(tail_p, 8)
            chunk_tail = tb_tail
        else:
            tb_tail = _round_up(tail_p, chunk_p)
            chunk_tail = chunk_p
        pad_rows = tb_tail * pack - tail
        x_tail = x[B_main:]
        if pad_rows:
            # Padded rows are zeros -> compute harmless relu(bias) values that
            # are sliced off below.
            x_tail = jnp.pad(x_tail, ((0, pad_rows), (0, 0)))
        xp_tail = x_tail.reshape(tb_tail, lw)
        y_tail = _mlp_call(xp_tail, w1p, b1p, w2p, b2s,
                           tb_p=tb_tail, chunk_p=chunk_tail)
        pieces.append(y_tail.reshape(tb_tail * pack, 1)[:tail])

    return pieces[0] if len(pieces) == 1 else jnp.concatenate(pieces, axis=0)


def init_params(key, n_inputs, hidden):
    """Deterministic parameter init mirroring the PyTorch module's __init__:
    hidden1: kaiming_uniform_ (relu), output: xavier_uniform_, biases use the
    default Linear bias init (uniform over +-1/sqrt(fan_in)).  w1 is stored
    pre-transposed as (n_inputs, hidden); w2 keeps PyTorch's (1, hidden) layout."""
    k1, k2, k3, k4 = jax.random.split(key, 4)

    bound1 = math.sqrt(6.0 / n_inputs)                       # kaiming_uniform_ (relu)
    w1 = jax.random.uniform(k1, (n_inputs, hidden), jnp.float32, -bound1, bound1)
    bb1 = 1.0 / math.sqrt(n_inputs)
    b1 = jax.random.uniform(k2, (1, hidden), jnp.float32, -bb1, bb1)

    bound2 = math.sqrt(6.0 / (hidden + 1))                   # xavier_uniform_
    w2 = jax.random.uniform(k3, (1, hidden), jnp.float32, -bound2, bound2)
    bb2 = 1.0 / math.sqrt(hidden)
    b2 = jax.random.uniform(k4, (1, 1), jnp.float32, -bb2, bb2)

    return w1, b1, w2, b2


if __name__ == "__main__":
    N_INPUTS = 16   # n_inputs
    H = 32          # hidden width (module-level `H` in the PyTorch script)

    key = jax.random.PRNGKey(0)
    kx1, kx2, kx3, kp = jax.random.split(key, 4)
    w1, b1, w2, b2 = init_params(kp, N_INPUTS, H)

    def reference(x):
        # Elementwise/highest-precision reference (no default-precision matmul).
        h = jnp.maximum(
            jnp.einsum("bi,ih->bh", x, w1, precision=jax.lax.Precision.HIGHEST) + b1,
            0.0)
        return jnp.maximum(
            jnp.einsum("bh,oh->bo", h, w2, precision=jax.lax.Precision.HIGHEST) + b2,
            0.0)

    def check(out, ref, name):
        err = float(jnp.max(jnp.abs(out - ref)))
        assert jnp.allclose(out, ref, atol=1e-4, rtol=1e-4), f"{name}: max |err| = {err}"

    # Case 1: aligned small batch -> single tile / single chunk path.
    x1 = jax.random.normal(kx1, (512, N_INPUTS), dtype=jnp.float32)
    out1 = jax.block_until_ready(network_forward(x1, w1, b1, w2, b2))
    assert out1.shape == (512, 1)
    check(out1, reference(x1), "case1")

    # Case 2: tiny, non-aligned batch -> padded tail-only path.
    x2 = jax.random.normal(kx2, (50, N_INPUTS), dtype=jnp.float32)
    out2 = jax.block_until_ready(network_forward(x2, w1, b1, w2, b2))
    assert out2.shape == (50, 1)
    check(out2, reference(x2), "case2")

    # Case 3: multi-tile grid + multi-chunk inner loop + unaligned tail.
    # Small tile/chunk overrides keep shapes small while exercising every path.
    x3 = jax.random.normal(kx3, (4100, N_INPUTS), dtype=jnp.float32)
    out3 = jax.block_until_ready(
        network_forward(x3, w1, b1, w2, b2, max_block_packed=128, chunk_packed=64))
    assert out3.shape == (4100, 1)
    check(out3, reference(x3), "case3")

    print("KERNEL_OK")
</pallas_src>

<mosaic_0001>
module attributes {stable_mosaic.version = 11 : i64} {
  func.func @mlp_kernel(%arg0: i32, %arg1: memref<64x128xf32, #tpu.memory_space<vmem>>, %arg2: memref<128x256xf32, #tpu.memory_space<vmem>>, %arg3: memref<1x256xf32, #tpu.memory_space<vmem>>, %arg4: memref<256x8xf32, #tpu.memory_space<vmem>>, %arg5: memref<1x1xf32, #tpu.memory_space<smem>>, %arg6: memref<64x8xf32, #tpu.memory_space<vmem>>) attributes {dimension_semantics = [#tpu.dimension_semantics<parallel>], iteration_bounds = array<i64: 1>, scalar_prefetch = 0 : i64, scratch_operands = 0 : i64, tpu.core_type = #tpu.core_type<tc>, window_params = [{transform_indices = @transform_0, window_bounds = array<i64: 64, 128>}, {pipeline_mode = #tpu.pipeline_mode<synchronous>, transform_indices = @transform_1, window_bounds = array<i64: 128, 256>}, {pipeline_mode = #tpu.pipeline_mode<synchronous>, transform_indices = @transform_2, window_bounds = array<i64: 1, 256>}, {pipeline_mode = #tpu.pipeline_mode<synchronous>, transform_indices = @transform_3, window_bounds = array<i64: 256, 8>}, {transform_indices = @transform_4, window_bounds = array<i64: 1, 1>}, {transform_indices = @transform_5, window_bounds = array<i64: 64, 8>}]} {
    %c0 = arith.constant 0 : index
    %c0_0 = arith.constant 0 : index
    %0 = vector.load %arg3[%c0, %c0_0] : memref<1x256xf32, #tpu.memory_space<vmem>>, vector<1x256xf32>
    %c0_1 = arith.constant 0 : index
    %c0_2 = arith.constant 0 : index
    %1 = memref.load %arg5[%c0_1, %c0_2] : memref<1x1xf32, #tpu.memory_space<smem>>
    %c0_i32 = arith.constant 0 : i32
    %c64_i32 = arith.constant 64 : i32
    %2 = arith.muli %c0_i32, %c64_i32 : i32
    %3 = tpu.assume_multiple %2, 8 : i32
    %4 = arith.index_cast %3 : i32 to index
    %c0_3 = arith.constant 0 : index
    %5 = vector.load %arg1[%4, %c0_3] : memref<64x128xf32, #tpu.memory_space<vmem>>, vector<64x128xf32>
    %c0_4 = arith.constant 0 : index
    %c0_5 = arith.constant 0 : index
    %6 = vector.load %arg2[%c0_4, %c0_5] : memref<128x256xf32, #tpu.memory_space<vmem>>, vector<128x256xf32>
    %cst = arith.constant dense<0.000000e+00> : vector<64x256xf32>
    %7 = tpu.matmul %5, %6, %cst {dimension_numbers = #tpu.dot_dimension_numbers<[1], [0], [0], [1], [0, 0, 1, 1], [], []>} : vector<64x128xf32>, vector<128x256xf32>, vector<64x256xf32> -> vector<64x256xf32>
    %8 = vector.broadcast %0 : vector<1x256xf32> to vector<64x256xf32>
    %9 = arith.addf %7, %8 : vector<64x256xf32>
    %cst_6 = arith.constant 0.000000e+00 : f32
    %10 = vector.broadcast %cst_6 : f32 to vector<64x256xf32>
    %11 = arith.maximumf %9, %10 : vector<64x256xf32>
    %c0_7 = arith.constant 0 : index
    %c0_8 = arith.constant 0 : index
    %12 = vector.load %arg4[%c0_7, %c0_8] : memref<256x8xf32, #tpu.memory_space<vmem>>, vector<256x8xf32>
    %cst_9 = arith.constant dense<0.000000e+00> : vector<64x8xf32>
    %13 = tpu.matmul %11, %12, %cst_9 {dimension_numbers = #tpu.dot_dimension_numbers<[1], [0], [0], [1], [0, 0, 1, 1], [], []>} : vector<64x256xf32>, vector<256x8xf32>, vector<64x8xf32> -> vector<64x8xf32>
    %14 = vector.broadcast %1 : f32 to vector<64x8xf32>
    %15 = arith.addf %13, %14 : vector<64x8xf32>
    %cst_10 = arith.constant 0.000000e+00 : f32
    %16 = vector.broadcast %cst_10 : f32 to vector<64x8xf32>
    %17 = arith.maximumf %15, %16 : vector<64x8xf32>
    %18 = arith.index_cast %3 : i32 to index
    %c0_11 = arith.constant 0 : index
    %19 = vector.load %arg6[%18, %c0_11] : memref<64x8xf32, #tpu.memory_space<vmem>>, vector<64x8xf32>
    tpu.vector_store %arg6[%18, %c0_11], %17 {strides = array<i32>} : memref<64x8xf32, #tpu.memory_space<vmem>>, vector<64x8xf32>,
    %c1_i32 = arith.constant 1 : i32
    return
  }
  func.func @transform_0(%arg0: i32) -> (i32, i32) {
    %c0_i32 = arith.constant 0 : i32
    %c0_i32_0 = arith.constant 0 : i32
    return %arg0, %c0_i32 : i32, i32
  }
  func.func @transform_1(%arg0: i32) -> (i32, i32) {
    %c0_i32 = arith.constant 0 : i32
    %c0_i32_0 = arith.constant 0 : i32
    %c0_i32_1 = arith.constant 0 : i32
    return %c0_i32, %c0_i32_0 : i32, i32
  }
  func.func @transform_2(%arg0: i32) -> (i32, i32) {
    %c0_i32 = arith.constant 0 : i32
    %c0_i32_0 = arith.constant 0 : i32
    %c0_i32_1 = arith.constant 0 : i32
    return %c0_i32, %c0_i32_0 : i32, i32
  }
  func.func @transform_3(%arg0: i32) -> (i32, i32) {
    %c0_i32 = arith.constant 0 : i32
    %c0_i32_0 = arith.constant 0 : i32
    %c0_i32_1 = arith.constant 0 : i32
    return %c0_i32, %c0_i32_0 : i32, i32
  }
  func.func @transform_4(%arg0: i32) -> (i32, i32) {
    %c0_i32 = arith.constant 0 : i32
    %c0_i32_0 = arith.constant 0 : i32
    %c0_i32_1 = arith.constant 0 : i32
    return %c0_i32, %c0_i32_0 : i32, i32
  }
  func.func @transform_5(%arg0: i32) -> (i32, i32) {
    %c0_i32 = arith.constant 0 : i32
    %c0_i32_0 = arith.constant 0 : i32
    return %arg0, %c0_i32 : i32, i32
  }
}

</mosaic_0001>

<llo_original>
// kernel: tpu_custom_call.1
$region0: #{tpu_custom_call.1}
  #allocation0 [shape = 'u32[]', space=smem, size = 0x4, offset = 0x4, fixed_abs, tag = 'smem constant byte address 0x4 - core index']
  #allocation1 [shape = 'u32[72,128]{1,0:T(1,128)}', space=vmem, size = 0x9000, scoped, tag = 'internal scratch']
  #allocation2 [shape = 'f32[1,1]{1,0:T(1,128)S(6)}', space=smem, size = 0x200, scoped, tag = 'scoped memory for tpu_custom_call.1']
  %s0 = inlined_call_operand.hbm [shape: f32[64,128], index: 0, kind: input, shape index: {}]
  %s1 = inlined_call_operand.vmem [shape: f32[128,256], index: 1, kind: input, shape index: {}]
  %s2 = inlined_call_operand.vmem [shape: f32[1,256], index: 2, kind: input, shape index: {}]
  %s3 = inlined_call_operand.vmem [shape: f32[256,8], index: 3, kind: input, shape index: {}]
  %s4 = inlined_call_operand.<no memory space> [shape: f32[1,1], index: 4, kind: input, shape index: {}]
  %s5 = inlined_call_operand.vmem [shape: f32[64,8], index: 5, kind: output, shape index: {}]
  %s6 = sld [smem:[#allocation0]]
  $region34: #{tpu_custom_call.1} parent=0
    _
  %s8 = ssub.s32 1, %s6
  %s9 = scalar_select 0, %s8, %s6
  %10 = sst [smem:[#allocation2]] %s4
  $region1: #{tpu_custom_call.1} parent=0
    #allocation3 [shape = 'u8[32768]{0}', space=vmem, size = 0x8000, scoped, tag = 'input window, operand 0, single buffered']
    #allocation4 [shape = 's32[1]{0}', space=sflag, size = 0x4, scoped, tag = 'scoped memory for tpu_custom_call.1']
    %11 = vsyncpa [#allocation4], 0
    // Predicated region
    $region2: #{tpu_custom_call.1} parent=1 // pred_check
      _
    $region3: #{tpu_custom_call.1} parent=1 // pred_check_branch
      %13 = sbr.rel (0) target = $region5
    $region4: #{tpu_custom_call.1} parent=1 // pred_region
      %15 = vsyncadd [#allocation4], 0
      %s16 = sshll.u32 %s0, 4
      %s17 = int_to_ptr.hbm [resolvable:$true] %s16
      %s18 = sshll.u32 [#allocation3], 4
      %s19 = int_to_ptr.vmem [resolvable:$true] %s18
      %24 = dma.hbm_to_vmem [thread:$0]  %s17, 1024, %s19, [#allocation4], 128, 128, 8
    $region5: #{tpu_custom_call.1} parent=1 // pred_fallthru
      _
    // Predicated region
    $region6: #{tpu_custom_call.1} parent=1 // pred_check
      _
    $region7: #{tpu_custom_call.1} parent=1 // pred_check_branch
      %26 = sbr.rel (0) target = $region9
    $region8: #{tpu_custom_call.1} parent=1 // pred_region
      _
    $region9: #{tpu_custom_call.1} parent=1 // pred_fallthru
      _
    // Predicated region
    $region10: #{tpu_custom_call.1} parent=1 // pred_check
      _
    $region11: #{tpu_custom_call.1} parent=1 // pred_check_branch
      %28 = sbr.rel (0) target = $region13
    $region12: #{tpu_custom_call.1} parent=1 // pred_region
      _
    $region13: #{tpu_custom_call.1} parent=1 // pred_fallthru
      _
    // Predicated region
    $region14: #{tpu_custom_call.1} parent=1 // pred_check
      _
    $region15: #{tpu_custom_call.1} parent=1 // pred_check_branch
      %30 = sbr.rel (0) target = $region17
    $region16: #{tpu_custom_call.1} parent=1 // pred_region
      _
    $region17: #{tpu_custom_call.1} parent=1 // pred_fallthru
      _
    // Predicated region
    $region18: #{tpu_custom_call.1} parent=1 // pred_check
      _
    $region19: #{tpu_custom_call.1} parent=1 // pred_check_branch
      %32 = sbr.rel (0) target = $region21
    $region20: #{tpu_custom_call.1} parent=1 // pred_region
      _
    $region21: #{tpu_custom_call.1} parent=1 // pred_fallthru
      _
    // Predicated region
    $region22: #{tpu_custom_call.1} parent=1 // pred_check
      _
    $region23: #{tpu_custom_call.1} parent=1 // pred_check_branch
      %34 = sbr.rel (0) target = $region25
    $region24: #{tpu_custom_call.1} parent=1 // pred_region
      %36 = dma.done [#allocation4], 1024
    $region25: #{tpu_custom_call.1} parent=1 // pred_fallthru
      _
    %v37 = vld [vmem:[%s2] sm:$0x3]
    %s38 = sld [smem:[#allocation2]]
    %v39 = vld [vmem:[#allocation3] sm:$0xff]
    %v40 = vld [vmem:[#allocation3 + $0x8] sm:$0xff]
    %v41 = vld [vmem:[#allocation3 + $0x10] sm:$0xff]
    %v42 = vld [vmem:[#allocation3 + $0x18] sm:$0xff]
    %v43 = vld [vmem:[#allocation3 + $0x20] sm:$0xff]
    %v44 = vld [vmem:[#allocation3 + $0x28] sm:$0xff]
    %v45 = vld [vmem:[#allocation3 + $0x30] sm:$0xff]
    %v46 = vld [vmem:[#allocation3 + $0x38] sm:$0xff]
    %v47 = vld [vmem:[%s1] sm:$0xff]
    %v48 = vld [vmem:[%s1 + $0x8] sm:$0xff]
    %v49 = vld [vmem:[%s1 + $0x10] sm:$0xff]
    %v50 = vld [vmem:[%s1 + $0x18] sm:$0xff]
    %v51 = vld [vmem:[%s1 + $0x20] sm:$0xff]
    %v52 = vld [vmem:[%s1 + $0x28] sm:$0xff]
    %v53 = vld [vmem:[%s1 + $0x30] sm:$0xff]
    %v54 = vld [vmem:[%s1 + $0x38] sm:$0xff]
    %v55 = vld [vmem:[%s1 + $0x40] sm:$0xff]
    %v56 = vld [vmem:[%s1 + $0x48] sm:$0xff]
    %v57 = vld [vmem:[%s1 + $0x50] sm:$0xff]
    %v58 = vld [vmem:[%s1 + $0x58] sm:$0xff]
    %v59 = vld [vmem:[%s1 + $0x60] sm:$0xff]
    %v60 = vld [vmem:[%s1 + $0x68] sm:$0xff]
    %v61 = vld [vmem:[%s1 + $0x70] sm:$0xff]
    %v62 = vld [vmem:[%s1 + $0x78] sm:$0xff]
    %v63 = vld [vmem:[%s1 + $0x80] sm:$0xff]
    %v64 = vld [vmem:[%s1 + $0x88] sm:$0xff]
    %v65 = vld [vmem:[%s1 + $0x90] sm:$0xff]
    %v66 = vld [vmem:[%s1 + $0x98] sm:$0xff]
    %v67 = vld [vmem:[%s1 + $0xa0] sm:$0xff]
    %v68 = vld [vmem:[%s1 + $0xa8] sm:$0xff]
    %v69 = vld [vmem:[%s1 + $0xb0] sm:$0xff]
    %v70 = vld [vmem:[%s1 + $0xb8] sm:$0xff]
    %v71 = vld [vmem:[%s1 + $0xc0] sm:$0xff]
    %v72 = vld [vmem:[%s1 + $0xc8] sm:$0xff]
    %v73 = vld [vmem:[%s1 + $0xd0] sm:$0xff]
    %v74 = vld [vmem:[%s1 + $0xd8] sm:$0xff]
    %v75 = vld [vmem:[%s1 + $0xe0] sm:$0xff]
    %v76 = vld [vmem:[%s1 + $0xe8] sm:$0xff]
    %v77 = vld [vmem:[%s1 + $0xf0] sm:$0xff]
    %v78 = vld [vmem:[%s1 + $0xf8] sm:$0xff]
    %v80 = vperm.slane %v37, 0
    %v81 = vperm.slane %v37, 1
    %84 = vmatpush.msra.mxu0 %v77
    %85 = vmatpush.msra.mxu0 %v75
    %86 = vmatpush.msra.mxu0 %v73
    %87 = vmatpush.msra.mxu0 %v71
    %88 = vmatpush.msra.mxu0 %v69
    %89 = vmatpush.msra.mxu0 %v67
    %90 = vmatpush.msra.mxu0 %v65
    %91 = vmatpush.msra.mxu0 %v63
    %92 = vmatpush.msra.mxu0 %v61
    %93 = vmatpush.msra.mxu0 %v59
    %94 = vmatpush.msra.mxu0 %v57
    %95 = vmatpush.msra.mxu0 %v55
    %96 = vmatpush.msra.mxu0 %v53
    %97 = vmatpush.msra.mxu0 %v51
    %98 = vmatpush.msra.mxu0 %v49
    %99 = vmatpush.msra.mxu0 %v47
    %100 = vmatmul.f32.gmra.mxu0 %v39
    %v101 = vpop.f32.mrf.mxu0
    %v102 = vadd.f32 %v80, %v101
    %103 = vmatmul.f32.gmra.mxu0 %v40
    %v104 = vpop.f32.mrf.mxu0
    %v105 = vadd.f32 %v80, %v104
    %106 = vmatmul.f32.gmra.mxu0 %v41
    %v107 = vpop.f32.mrf.mxu0
    %v108 = vadd.f32 %v80, %v107
    %109 = vmatmul.f32.gmra.mxu0 %v42
    %v110 = vpop.f32.mrf.mxu0
    %v111 = vadd.f32 %v80, %v110
    %112 = vmatmul.f32.gmra.mxu0 %v43
    %v113 = vpop.f32.mrf.mxu0
    %v114 = vadd.f32 %v80, %v113
    %115 = vmatmul.f32.gmra.mxu0 %v44
    %v116 = vpop.f32.mrf.mxu0
    %v117 = vadd.f32 %v80, %v116
    %118 = vmatmul.f32.gmra.mxu0 %v45
    %v119 = vpop.f32.mrf.mxu0
    %v120 = vadd.f32 %v80, %v119
    %121 = vmatmul.f32.gmra.mxu0 %v46
    %v122 = vpop.f32.mrf.mxu0
    %v123 = vadd.f32 %v80, %v122
    %124 = vdwg.mxu0
    %125 = vmatpush.msra.mxu0 %v78
    %126 = vmatpush.msra.mxu0 %v76
    %127 = vmatpush.msra.mxu0 %v74
    %128 = vmatpush.msra.mxu0 %v72
    %129 = vmatpush.msra.mxu0 %v70
    %130 = vmatpush.msra.mxu0 %v68
    %131 = vmatpush.msra.mxu0 %v66
    %132 = vmatpush.msra.mxu0 %v64
    %133 = vmatpush.msra.mxu0 %v62
    %134 = vmatpush.msra.mxu0 %v60
    %135 = vmatpush.msra.mxu0 %v58
    %136 = vmatpush.msra.mxu0 %v56
    %137 = vmatpush.msra.mxu0 %v54
    %138 = vmatpush.msra.mxu0 %v52
    %139 = vmatpush.msra.mxu0 %v50
    %140 = vmatpush.msra.mxu0 %v48
    %141 = vmatmul.f32.gmra.mxu0 %v39
    %v142 = vpop.f32.mrf.mxu0
    %v143 = vadd.f32 %v81, %v142
    %144 = vmatmul.f32.gmra.mxu0 %v40
    %v145 = vpop.f32.mrf.mxu0
    %v146 = vadd.f32 %v81, %v145
    %147 = vmatmul.f32.gmra.mxu0 %v41
    %v148 = vpop.f32.mrf.mxu0
    %v149 = vadd.f32 %v81, %v148
    %150 = vmatmul.f32.gmra.mxu0 %v42
    %v151 = vpop.f32.mrf.mxu0
    %v152 = vadd.f32 %v81, %v151
    %153 = vmatmul.f32.gmra.mxu0 %v43
    %v154 = vpop.f32.mrf.mxu0
    %v155 = vadd.f32 %v81, %v154
    %156 = vmatmul.f32.gmra.mxu0 %v44
    %v157 = vpop.f32.mrf.mxu0
    %v158 = vadd.f32 %v81, %v157
    %159 = vmatmul.f32.gmra.mxu0 %v45
    %v160 = vpop.f32.mrf.mxu0
    %v161 = vadd.f32 %v81, %v160
    %162 = vmatmul.f32.gmra.mxu0 %v46
    %v163 = vpop.f32.mrf.mxu0
    %v164 = vadd.f32 %v81, %v163
    %165 = vdwg.mxu0
    %v166 = vmax.f32 %v102, 0.0
    %v167 = vmax.f32 %v143, 0.0
    %v168 = vmax.f32 %v105, 0.0
    %v169 = vmax.f32 %v146, 0.0
    %v170 = vmax.f32 %v108, 0.0
    %v171 = vmax.f32 %v149, 0.0
    %v172 = vmax.f32 %v111, 0.0
    %v173 = vmax.f32 %v152, 0.0
    %v174 = vmax.f32 %v114, 0.0
    %v175 = vmax.f32 %v155, 0.0
    %v176 = vmax.f32 %v117, 0.0
    %v177 = vmax.f32 %v158, 0.0
    %v178 = vmax.f32 %v120, 0.0
    %v179 = vmax.f32 %v161, 0.0
    %v180 = vmax.f32 %v123, 0.0
    %v181 = vmax.f32 %v164, 0.0
    %v182 = vld [vmem:[%s3] sm:$0xff]
    %v183 = vld [vmem:[%s3 + $0x8] sm:$0xff]
    %v184 = vld [vmem:[%s3 + $0x10] sm:$0xff]
    %v185 = vld [vmem:[%s3 + $0x18] sm:$0xff]
    %v186 = vld [vmem:[%s3 + $0x20] sm:$0xff]
    %v187 = vld [vmem:[%s3 + $0x28] sm:$0xff]
    %v188 = vld [vmem:[%s3 + $0x30] sm:$0xff]
    %v189 = vld [vmem:[%s3 + $0x38] sm:$0xff]
    %v190 = vld [vmem:[%s3 + $0x40] sm:$0xff]
    %v191 = vld [vmem:[%s3 + $0x48] sm:$0xff]
    %v192 = vld [vmem:[%s3 + $0x50] sm:$0xff]
    %v193 = vld [vmem:[%s3 + $0x58] sm:$0xff]
    %v194 = vld [vmem:[%s3 + $0x60] sm:$0xff]
    %v195 = vld [vmem:[%s3 + $0x68] sm:$0xff]
    %v196 = vld [vmem:[%s3 + $0x70] sm:$0xff]
    %v197 = vld [vmem:[%s3 + $0x78] sm:$0xff]
    %v198 = vld [vmem:[%s3 + $0x80] sm:$0xff]
    %v199 = vld [vmem:[%s3 + $0x88] sm:$0xff]
    %v200 = vld [vmem:[%s3 + $0x90] sm:$0xff]
    %v201 = vld [vmem:[%s3 + $0x98] sm:$0xff]
    %v202 = vld [vmem:[%s3 + $0xa0] sm:$0xff]
    %v203 = vld [vmem:[%s3 + $0xa8] sm:$0xff]
    %v204 = vld [vmem:[%s3 + $0xb0] sm:$0xff]
    %v205 = vld [vmem:[%s3 + $0xb8] sm:$0xff]
    %v206 = vld [vmem:[%s3 + $0xc0] sm:$0xff]
    %v207 = vld [vmem:[%s3 + $0xc8] sm:$0xff]
    %v208 = vld [vmem:[%s3 + $0xd0] sm:$0xff]
    %v209 = vld [vmem:[%s3 + $0xd8] sm:$0xff]
    %v210 = vld [vmem:[%s3 + $0xe0] sm:$0xff]
    %v211 = vld [vmem:[%s3 + $0xe8] sm:$0xff]
    %v212 = vld [vmem:[%s3 + $0xf0] sm:$0xff]
    %v213 = vld [vmem:[%s3 + $0xf8] sm:$0xff]
    %v214 = vstv %s38
    %215 = vmatpush.msra.mxu0 %v197
    %216 = vmatpush.msra.mxu0 %v196
    %217 = vmatpush.msra.mxu0 %v195
    %218 = vmatpush.msra.mxu0 %v194
    %219 = vmatpush.msra.mxu0 %v193
    %220 = vmatpush.msra.mxu0 %v192
    %221 = vmatpush.msra.mxu0 %v191
    %222 = vmatpush.msra.mxu0 %v190
    %223 = vmatpush.msra.mxu0 %v189
    %224 = vmatpush.msra.mxu0 %v188
    %225 = vmatpush.msra.mxu0 %v187
    %226 = vmatpush.msra.mxu0 %v186
    %227 = vmatpush.msra.mxu0 %v185
    %228 = vmatpush.msra.mxu0 %v184
    %229 = vmatpush.msra.mxu0 %v183
    %230 = vmatpush.msra.mxu0 %v182
    %231 = vmatmul.f32.gmra.mxu0 %v166
    %v232 = vpop.f32.mrf.mxu0
    %v233 = vadd.f32 %v214, %v232
    %234 = vmatmul.f32.gmra.mxu0 %v168
    %v235 = vpop.f32.mrf.mxu0
    %v236 = vadd.f32 %v214, %v235
    %237 = vmatmul.f32.gmra.mxu0 %v170
    %v238 = vpop.f32.mrf.mxu0
    %v239 = vadd.f32 %v214, %v238
    %240 = vmatmul.f32.gmra.mxu0 %v172
    %v241 = vpop.f32.mrf.mxu0
    %v242 = vadd.f32 %v214, %v241
    %243 = vmatmul.f32.gmra.mxu0 %v174
    %v244 = vpop.f32.mrf.mxu0
    %v245 = vadd.f32 %v214, %v244
    %246 = vmatmul.f32.gmra.mxu0 %v176
    %v247 = vpop.f32.mrf.mxu0
    %v248 = vadd.f32 %v214, %v247
    %249 = vmatmul.f32.gmra.mxu0 %v178
    %v250 = vpop.f32.mrf.mxu0
    %v251 = vadd.f32 %v214, %v250
    %252 = vmatmul.f32.gmra.mxu0 %v180
    %v253 = vpop.f32.mrf.mxu0
    %v254 = vadd.f32 %v214, %v253
    %255 = vdwg.mxu0
    %256 = vmatpush.msra.mxu0 %v213
    %257 = vmatpush.msra.mxu0 %v212
    %258 = vmatpush.msra.mxu0 %v211
    %259 = vmatpush.msra.mxu0 %v210
    %260 = vmatpush.msra.mxu0 %v209
    %261 = vmatpush.msra.mxu0 %v208
    %262 = vmatpush.msra.mxu0 %v207
    %263 = vmatpush.msra.mxu0 %v206
    %264 = vmatpush.msra.mxu0 %v205
    %265 = vmatpush.msra.mxu0 %v204
    %266 = vmatpush.msra.mxu0 %v203
    %267 = vmatpush.msra.mxu0 %v202
    %268 = vmatpush.msra.mxu0 %v201
    %269 = vmatpush.msra.mxu0 %v200
    %270 = vmatpush.msra.mxu0 %v199
    %271 = vmatpush.msra.mxu0 %v198
    %272 = vmatmul.f32.gmra.mxu0 %v167
    %v273 = vpop.f32.mrf.mxu0
    %v274 = vadd.f32 %v233, %v273
    %275 = vmatmul.f32.gmra.mxu0 %v169
    %v276 = vpop.f32.mrf.mxu0
    %v277 = vadd.f32 %v236, %v276
    %278 = vmatmul.f32.gmra.mxu0 %v171
    %v279 = vpop.f32.mrf.mxu0
    %v280 = vadd.f32 %v239, %v279
    %281 = vmatmul.f32.gmra.mxu0 %v173
    %v282 = vpop.f32.mrf.mxu0
    %v283 = vadd.f32 %v242, %v282
    %284 = vmatmul.f32.gmra.mxu0 %v175
    %v285 = vpop.f32.mrf.mxu0
    %v286 = vadd.f32 %v245, %v285
    %287 = vmatmul.f32.gmra.mxu0 %v177
    %v288 = vpop.f32.mrf.mxu0
    %v289 = vadd.f32 %v248, %v288
    %290 = vmatmul.f32.gmra.mxu0 %v179
    %v291 = vpop.f32.mrf.mxu0
    %v292 = vadd.f32 %v251, %v291
    %293 = vmatmul.f32.gmra.mxu0 %v181
    %v294 = vpop.f32.mrf.mxu0
    %v295 = vadd.f32 %v254, %v294
    %296 = vdwg.mxu0
    %v297 = vmax.f32 %v274, 0.0
    %v298 = vmax.f32 %v277, 0.0
    %v299 = vmax.f32 %v280, 0.0
    %v300 = vmax.f32 %v283, 0.0
    %v301 = vmax.f32 %v286, 0.0
    %v302 = vmax.f32 %v289, 0.0
    %v303 = vmax.f32 %v292, 0.0
    %v304 = vmax.f32 %v295, 0.0
    %vm305 = vcmask 64512
    %306 = vst.msk [vmem:[%s5] sm:$0xff] %vm305, %v297
    %307 = vst.msk [vmem:[%s5 + $0x8] sm:$0xff] %vm305, %v298
    %308 = vst.msk [vmem:[%s5 + $0x10] sm:$0xff] %vm305, %v299
    %309 = vst.msk [vmem:[%s5 + $0x18] sm:$0xff] %vm305, %v300
    %310 = vst.msk [vmem:[%s5 + $0x20] sm:$0xff] %vm305, %v301
    %311 = vst.msk [vmem:[%s5 + $0x28] sm:$0xff] %vm305, %v302
    %312 = vst.msk [vmem:[%s5 + $0x30] sm:$0xff] %vm305, %v303
    %313 = vst.msk [vmem:[%s5 + $0x38] sm:$0xff] %vm305, %v304
    // Predicated region
    $region26: #{tpu_custom_call.1} parent=1 // pred_check
      _
    $region27: #{tpu_custom_call.1} parent=1 // pred_check_branch
      %315 = sbr.rel (0) target = $region29
    $region28: #{tpu_custom_call.1} parent=1 // pred_region
      _
    $region29: #{tpu_custom_call.1} parent=1 // pred_fallthru
      _
    // Predicated region
    $region30: #{tpu_custom_call.1} parent=1 // pred_check
      _
    $region31: #{tpu_custom_call.1} parent=1 // pred_check_branch
      %317 = sbr.rel (0) target = $region33
    $region32: #{tpu_custom_call.1} parent=1 // pred_region
      _
    $region33: #{tpu_custom_call.1} parent=1 // pred_fallthru
      _
    %318 = vsyncpa [#allocation4], 1

</llo_original>
